<compile_context>
chip_gen: v5e
topology: v5e:2x2
jax: 0.10.0
libtpu: 0.0.40
codegen_flags: <defaults>
</compile_context>

<pallas_src>
import numpy as np
import jax
import jax.numpy as jnp
from jax.experimental import pallas as pl
from jax.experimental.pallas import tpu as pltpu

EPS = 1e-5  # PyTorch LayerNorm default


# ---------------------------------------------------------------- kernel -----

def embeddings_kernel(idx_ref,   # [S, 3] int32  packed (word, pos+V, seg+V+P) indices
                      tab_ref,   # [128, H] f32  packed (word|pos|seg) table, zero-padded
                      ln_ref,    # [2, H]   f32  row0 = gamma, row1 = beta
                      o_ref):    # [S, H]   f32  output
    """Fused word+position+segment embedding lookup + add + LayerNorm.

    The three lookups are expressed as a single multi-hot (S, 128) @ table
    matmul: the packed index ranges are disjoint, so OR-ing the three equality
    masks is exact, the padded table rows (K in [V+P+G, 128)) are never hit,
    and the padding_idx rows of each sub-table are zero, matching
    nn.Embedding(padding_idx=...).
    """
    S = idx_ref.shape[0]
    K = tab_ref.shape[0]  # 128 (one lane width / one MXU K pass)

    idx = idx_ref[...]                                            # [S, 3]
    iota = jax.lax.broadcasted_iota(jnp.int32, (S, K), 1)         # [S, 128]
    multi_hot = ((idx[:, 0:1] == iota) |
                 (idx[:, 1:2] == iota) |
                 (idx[:, 2:3] == iota)).astype(jnp.float32)       # [S, 128]

    x = jnp.dot(multi_hot, tab_ref[...],
                preferred_element_type=jnp.float32)               # [S, H]

    mean = jnp.mean(x, axis=-1, keepdims=True)
    var = jnp.mean((x - mean) ** 2, axis=-1, keepdims=True)
    o_ref[...] = ((x - mean) * jax.lax.rsqrt(var + EPS)
                  * ln_ref[0:1, :] + ln_ref[1:2, :])
    # dropout: identity in eval mode


# --------------------------------------------------------------- wrapper -----

def pallas_embeddings(idx, packed_table, packed_ln):
    S = idx.shape[0]
    H = packed_table.shape[1]
    vmem = pl.BlockSpec(memory_space=pltpu.MemorySpace.VMEM)
    return pl.pallas_call(
        embeddings_kernel,
        out_shape=jax.ShapeDtypeStruct((S, H), jnp.float32),
        in_specs=[vmem, vmem, vmem],
        out_specs=vmem,
    )(idx, packed_table, packed_ln)


# ------------------------------------------------ params & host packing ------

def init_params(key, H, V, P, G, word_pad):
    k0, k1, k2 = jax.random.split(key, 3)

    def nrm(k, shape, scale=0.02):
        return (scale * jax.random.normal(k, shape)).astype(jnp.float32)

    # nn.Embedding padding_idx rows are zero
    word_emb = nrm(k0, (V, H)).at[word_pad].set(0.0)
    pos_emb = nrm(k1, (P, H)).at[P - 1].set(0.0)
    seg_emb = nrm(k2, (G, H)).at[G - 1].set(0.0)
    ln_g = jnp.ones((H,), jnp.float32)
    ln_b = jnp.zeros((H,), jnp.float32)

    # Packed, kernel-ready tensors (built once, reused every forward call).
    K = V + P + G
    K_pad = 128  # one lane width; padded rows are zero and never selected
    packed_table = jnp.zeros((K_pad, H), jnp.float32)
    packed_table = packed_table.at[:K].set(
        jnp.concatenate([word_emb, pos_emb, seg_emb], axis=0))
    packed_ln = jnp.stack([ln_g, ln_b], axis=0)  # [2, H]

    return {
        "word_emb": word_emb, "pos_emb": pos_emb, "seg_emb": seg_emb,
        "ln_g": ln_g, "ln_b": ln_b,
        "packed_table": packed_table, "packed_ln": packed_ln,
    }


def build_embedding_ids_np(input_ids_list, V, P, G, word_pad):
    """Replicates Embeddings.forward id bookkeeping + padding() in host numpy.

    Returns the packed [S, 3] index array (word, pos+V, seg+V+P), the padding
    mask [1, S], and the raw (ids, pos, seg) for the pure-JAX reference.
    """
    ids_np = [np.asarray(a) for a in input_ids_list]
    ids_np = [a if i == 0 else a[:, 1:] for i, a in enumerate(ids_np)]
    B = ids_np[0].shape[0]
    assert B == 1, "Embeddings.padding() collapses batch to row 0; only B=1 supported"

    seq_len = [a.shape[1] for a in ids_np]
    ids = np.concatenate(ids_np, axis=-1)[0].astype(np.int32)
    pos = np.concatenate([np.arange(L, dtype=np.int32) for L in seq_len])
    seg = np.concatenate([np.full((L,), k, dtype=np.int32)
                          for k, L in enumerate(seq_len)])

    S0 = ids.shape[0]
    if S0 < P:  # padding() pads each stream with its own padding_idx
        ids = np.pad(ids, (0, P - S0), constant_values=word_pad)
        pos = np.pad(pos, (0, P - S0), constant_values=P - 1)
        seg = np.pad(seg, (0, P - S0), constant_values=G - 1)
    padding_mask = (ids == word_pad)[None, :]

    packed_idx = np.stack([ids, pos + V, seg + V + P], axis=1).astype(np.int32)  # [S,3]
    return packed_idx, padding_mask, ids, pos, seg


def embeddings_forward(params, input_ids_list, V, P, G, word_pad):
    packed_idx, pad_mask, _, _, _ = build_embedding_ids_np(
        input_ids_list, V, P, G, word_pad)
    emb = pallas_embeddings(jnp.asarray(packed_idx),
                            params["packed_table"], params["packed_ln"])
    return emb[None, :, :], jnp.asarray(pad_mask)   # ([1, S, H], [1, S])


# ----------------------------------------------- pure-JAX reference check ----

def reference_forward(params, input_ids_list, V, P, G, word_pad):
    _, pad_mask, ids, pos, seg = build_embedding_ids_np(
        input_ids_list, V, P, G, word_pad)
    x = (params["word_emb"][jnp.asarray(ids)]
         + params["pos_emb"][jnp.asarray(pos)]
         + params["seg_emb"][jnp.asarray(seg)])
    m = jnp.mean(x, -1, keepdims=True)
    v = jnp.mean((x - m) ** 2, -1, keepdims=True)
    x = (x - m) * jax.lax.rsqrt(v + EPS) * params["ln_g"][None, :] + params["ln_b"][None, :]
    return x[None, :, :], jnp.asarray(pad_mask)


# ------------------------------------------------------------------- main ----

if __name__ == "__main__":
    # module config (small)
    hidden_size = 32
    vocab_size = 64
    max_position_size = 16     # == max_seq_len S
    max_segment = 4
    word_emb_padding_idx = 0
    dropout_rate = 0.1         # eval mode -> identity

    key = jax.random.PRNGKey(0)
    pkey, k1, k2 = jax.random.split(key, 3)
    params = init_params(pkey, hidden_size, vocab_size,
                         max_position_size, max_segment, word_emb_padding_idx)

    # two "clinical code" segments, batch=1 (tokens in [1, vocab-1] so only pads
    # hit padding_idx); the first token of segment 2 is dropped inside forward.
    ids_a = jax.random.randint(k1, (1, 5), 1, vocab_size, dtype=jnp.int32)
    ids_b = jax.random.randint(k2, (1, 6), 1, vocab_size, dtype=jnp.int32)
    input_ids_list = [ids_a, ids_b]

    emb, pad_mask = embeddings_forward(params, input_ids_list,
                                       vocab_size, max_position_size,
                                       max_segment, word_emb_padding_idx)
    emb = jax.block_until_ready(emb)

    ref_emb, ref_mask = reference_forward(params, input_ids_list,
                                          vocab_size, max_position_size,
                                          max_segment, word_emb_padding_idx)
    np.testing.assert_allclose(np.asarray(emb), np.asarray(ref_emb),
                               rtol=1e-4, atol=1e-5)
    np.testing.assert_array_equal(np.asarray(pad_mask), np.asarray(ref_mask))

    assert emb.shape == (1, max_position_size, hidden_size)
    assert pad_mask.shape == (1, max_position_size)
    print("KERNEL_OK")
</pallas_src>

<mosaic_0001>
module attributes {stable_mosaic.version = 11 : i64} {
  func.func @embeddings_kernel(%arg0: memref<16x3xi32, #tpu.memory_space<vmem>>, %arg1: memref<128x32xf32, #tpu.memory_space<vmem>>, %arg2: memref<2x32xf32, #tpu.memory_space<vmem>>, %arg3: memref<16x32xf32, #tpu.memory_space<vmem>>) attributes {dimension_semantics = [], scalar_prefetch = 0 : i64, scratch_operands = 0 : i64, tpu.core_type = #tpu.core_type<tc>} {
    %c0 = arith.constant 0 : index
    %c0_0 = arith.constant 0 : index
    %0 = vector.load %arg0[%c0, %c0_0] : memref<16x3xi32, #tpu.memory_space<vmem>>, vector<16x3xi32>
    %1 = tpu.iota {dimensions = array<i32: 1>} : vector<16x128xi32>
    %2 = vector.extract_strided_slice %0 {offsets = [0, 0], sizes = [16, 1], strides = [1, 1]} : vector<16x3xi32> to vector<16x1xi32>
    %3 = vector.broadcast %2 : vector<16x1xi32> to vector<16x128xi32>
    %4 = arith.cmpi eq, %3, %1 : vector<16x128xi32>
    %5 = vector.extract_strided_slice %0 {offsets = [0, 1], sizes = [16, 1], strides = [1, 1]} : vector<16x3xi32> to vector<16x1xi32>
    %6 = vector.broadcast %5 : vector<16x1xi32> to vector<16x128xi32>
    %7 = arith.cmpi eq, %6, %1 : vector<16x128xi32>
    %8 = arith.ori %4, %7 : vector<16x128xi1>
    %9 = vector.extract_strided_slice %0 {offsets = [0, 2], sizes = [16, 1], strides = [1, 1]} : vector<16x3xi32> to vector<16x1xi32>
    %10 = vector.broadcast %9 : vector<16x1xi32> to vector<16x128xi32>
    %11 = arith.cmpi eq, %10, %1 : vector<16x128xi32>
    %12 = arith.ori %8, %11 : vector<16x128xi1>
    %13 = arith.extui %12 : vector<16x128xi1> to vector<16x128xi32>
    %14 = arith.sitofp %13 : vector<16x128xi32> to vector<16x128xf32>
    %c0_1 = arith.constant 0 : index
    %c0_2 = arith.constant 0 : index
    %15 = vector.load %arg1[%c0_1, %c0_2] : memref<128x32xf32, #tpu.memory_space<vmem>>, vector<128x32xf32>
    %cst = arith.constant dense<0.000000e+00> : vector<16x32xf32>
    %16 = tpu.matmul %14, %15, %cst {dimension_numbers = #tpu.dot_dimension_numbers<[1], [0], [0], [1], [0, 0, 1, 1], [], []>} : vector<16x128xf32>, vector<128x32xf32>, vector<16x32xf32> -> vector<16x32xf32>
    %cst_3 = arith.constant dense<0.000000e+00> : vector<16xf32>
    %17 = vector.multi_reduction <add>, %16, %cst_3 [1] : vector<16x32xf32> to vector<16xf32>
    %18 = vector.shape_cast %17 : vector<16xf32> to vector<16x1xf32>
    %cst_4 = arith.constant 3.200000e+01 : f32
    %19 = vector.broadcast %cst_4 : f32 to vector<16x1xf32>
    %20 = arith.divf %18, %19 : vector<16x1xf32>
    %21 = vector.broadcast %20 : vector<16x1xf32> to vector<16x32xf32>
    %22 = arith.subf %16, %21 : vector<16x32xf32>
    %23 = arith.mulf %22, %22 : vector<16x32xf32>
    %cst_5 = arith.constant dense<0.000000e+00> : vector<16xf32>
    %24 = vector.multi_reduction <add>, %23, %cst_5 [1] : vector<16x32xf32> to vector<16xf32>
    %25 = vector.shape_cast %24 : vector<16xf32> to vector<16x1xf32>
    %cst_6 = arith.constant 3.200000e+01 : f32
    %26 = vector.broadcast %cst_6 : f32 to vector<16x1xf32>
    %27 = arith.divf %25, %26 : vector<16x1xf32>
    %28 = vector.broadcast %20 : vector<16x1xf32> to vector<16x32xf32>
    %29 = arith.subf %16, %28 : vector<16x32xf32>
    %cst_7 = arith.constant 9.99999974E-6 : f32
    %30 = vector.broadcast %cst_7 : f32 to vector<16x1xf32>
    %31 = arith.addf %27, %30 : vector<16x1xf32>
    %32 = math.rsqrt %31 : vector<16x1xf32>
    %33 = vector.broadcast %32 : vector<16x1xf32> to vector<16x32xf32>
    %34 = arith.mulf %29, %33 : vector<16x32xf32>
    %c0_8 = arith.constant 0 : index
    %c0_9 = arith.constant 0 : index
    %35 = vector.load %arg2[%c0_8, %c0_9] : memref<2x32xf32, #tpu.memory_space<vmem>>, vector<1x32xf32>
    %36 = vector.broadcast %35 : vector<1x32xf32> to vector<16x32xf32>
    %37 = arith.mulf %34, %36 : vector<16x32xf32>
    %c1 = arith.constant 1 : index
    %c0_10 = arith.constant 0 : index
    %38 = vector.load %arg2[%c1, %c0_10] : memref<2x32xf32, #tpu.memory_space<vmem>>, vector<1x32xf32>
    %39 = vector.broadcast %38 : vector<1x32xf32> to vector<16x32xf32>
    %40 = arith.addf %37, %39 : vector<16x32xf32>
    %c0_11 = arith.constant 0 : index
    %c0_12 = arith.constant 0 : index
    %41 = vector.load %arg3[%c0_11, %c0_12] : memref<16x32xf32, #tpu.memory_space<vmem>>, vector<16x32xf32>
    tpu.vector_store %arg3[%c0_11, %c0_12], %40 {strides = array<i32>} : memref<16x32xf32, #tpu.memory_space<vmem>>, vector<16x32xf32>,
    return
  }
}

</mosaic_0001>

<llo_original>
// kernel: tpu_custom_call.1
$region0: #{tpu_custom_call.1}
  #allocation0 [shape = 'u32[]', space=smem, size = 0x4, offset = 0x4, fixed_abs, tag = 'smem constant byte address 0x4 - core index']
  #allocation1 [shape = 'u32[72,128]{1,0:T(1,128)}', space=vmem, size = 0x9000, scoped, tag = 'internal scratch']
  %s0 = inlined_call_operand.vmem [shape: s32[16,3], index: 0, kind: input, shape index: {}]
  %s1 = inlined_call_operand.vmem [shape: f32[128,32], index: 1, kind: input, shape index: {}]
  %s2 = inlined_call_operand.vmem [shape: f32[2,32], index: 2, kind: input, shape index: {}]
  %s3 = inlined_call_operand.hbm [shape: f32[16,32], index: 3, kind: output, shape index: {}]
  %s4 = sld [smem:[#allocation0]]
  $region22: #{tpu_custom_call.1} parent=0
    _
  %s6 = ssub.s32 1, %s4
  %s7 = scalar_select 0, %s6, %s4
  $region1: #{tpu_custom_call.1} parent=0
    #allocation2 [shape = 'u8[8192]{0}', space=vmem, size = 0x2000, scoped, tag = 'output window, operand 0, single buffered']
    #allocation3 [shape = 's32[1]{0}', space=sflag, size = 0x4, scoped, tag = 'scoped memory for tpu_custom_call.1']
    %8 = vsyncpa [#allocation3], 0
    // Predicated region
    $region2: #{tpu_custom_call.1} parent=1 // pred_check
      _
    $region3: #{tpu_custom_call.1} parent=1 // pred_check_branch
      %10 = sbr.rel (0) target = $region5
    $region4: #{tpu_custom_call.1} parent=1 // pred_region
      _
    $region5: #{tpu_custom_call.1} parent=1 // pred_fallthru
      _
    // Predicated region
    $region6: #{tpu_custom_call.1} parent=1 // pred_check
      _
    $region7: #{tpu_custom_call.1} parent=1 // pred_check_branch
      %12 = sbr.rel (0) target = $region9
    $region8: #{tpu_custom_call.1} parent=1 // pred_region
      _
    $region9: #{tpu_custom_call.1} parent=1 // pred_fallthru
      _
    // Predicated region
    $region10: #{tpu_custom_call.1} parent=1 // pred_check
      _
    $region11: #{tpu_custom_call.1} parent=1 // pred_check_branch
      %14 = sbr.rel (0) target = $region13
    $region12: #{tpu_custom_call.1} parent=1 // pred_region
      _
    $region13: #{tpu_custom_call.1} parent=1 // pred_fallthru
      _
    %v15 = vld [vmem:[%s0] sm:$0xff]
    %v16 = vld [vmem:[%s0 + $0x8] sm:$0xff]
    %v17 = vlaneseq
    %v18 = vand.u32 %v17, 127
    %19 = vset.pattern.permute.xlu0 0
    %20 = vperm.xlu0 %19, %v15
    %v21 = vpop.permute.xlu0 %20
    %22 = vset.pattern.permute.xlu0 0
    %23 = vperm.xlu0 %22, %v16
    %v24 = vpop.permute.xlu0 %23
    %vm25 = vcmp.eq.s32.totalorder %v21, %v18
    %vm26 = vcmp.eq.s32.totalorder %v24, %v18
    %27 = vset.pattern.permute.xlu0 1
    %28 = vperm.xlu0 %27, %v15
    %v29 = vpop.permute.xlu0 %28
    %30 = vset.pattern.permute.xlu0 1
    %31 = vperm.xlu0 %30, %v16
    %v32 = vpop.permute.xlu0 %31
    %vm33 = vcmp.eq.s32.totalorder %v29, %v18
    %vm34 = vcmp.eq.s32.totalorder %v32, %v18
    %vm35 = vmor %vm25, %vm33
    %vm36 = vmor %vm26, %vm34
    %37 = vset.pattern.permute.xlu0 2
    %38 = vperm.xlu0 %37, %v15
    %v39 = vpop.permute.xlu0 %38
    %40 = vset.pattern.permute.xlu0 2
    %41 = vperm.xlu0 %40, %v16
    %v42 = vpop.permute.xlu0 %41
    %vm43 = vcmp.eq.s32.totalorder %v39, %v18
    %vm44 = vcmp.eq.s32.totalorder %v42, %v18
    %vm45 = vmor %vm35, %vm43
    %vm46 = vmor %vm36, %vm44
    %v47 = vsel %vm45, 1, 0
    %v48 = vsel %vm46, 1, 0
    %v49 = vcvt.s32.f32 %v47
    %v50 = vcvt.s32.f32 %v48
    %v51 = vld [vmem:[%s1] sm:$0xff]
    %v52 = vld [vmem:[%s1 + $0x8] sm:$0xff]
    %v53 = vld [vmem:[%s1 + $0x10] sm:$0xff]
    %v54 = vld [vmem:[%s1 + $0x18] sm:$0xff]
    %v55 = vld [vmem:[%s1 + $0x20] sm:$0xff]
    %v56 = vld [vmem:[%s1 + $0x28] sm:$0xff]
    %v57 = vld [vmem:[%s1 + $0x30] sm:$0xff]
    %v58 = vld [vmem:[%s1 + $0x38] sm:$0xff]
    %v59 = vld [vmem:[%s1 + $0x40] sm:$0xff]
    %v60 = vld [vmem:[%s1 + $0x48] sm:$0xff]
    %v61 = vld [vmem:[%s1 + $0x50] sm:$0xff]
    %v62 = vld [vmem:[%s1 + $0x58] sm:$0xff]
    %v63 = vld [vmem:[%s1 + $0x60] sm:$0xff]
    %v64 = vld [vmem:[%s1 + $0x68] sm:$0xff]
    %v65 = vld [vmem:[%s1 + $0x70] sm:$0xff]
    %v66 = vld [vmem:[%s1 + $0x78] sm:$0xff]
    %67 = vmatpush.msra.mxu0 %v66
    %68 = vmatpush.msra.mxu0 %v65
    %69 = vmatpush.msra.mxu0 %v64
    %70 = vmatpush.msra.mxu0 %v63
    %71 = vmatpush.msra.mxu0 %v62
    %72 = vmatpush.msra.mxu0 %v61
    %73 = vmatpush.msra.mxu0 %v60
    %74 = vmatpush.msra.mxu0 %v59
    %75 = vmatpush.msra.mxu0 %v58
    %76 = vmatpush.msra.mxu0 %v57
    %77 = vmatpush.msra.mxu0 %v56
    %78 = vmatpush.msra.mxu0 %v55
    %79 = vmatpush.msra.mxu0 %v54
    %80 = vmatpush.msra.mxu0 %v53
    %81 = vmatpush.msra.mxu0 %v52
    %82 = vmatpush.msra.mxu0 %v51
    %83 = vmatmul.f32.gmra.mxu0 %v49
    %v84 = vpop.f32.mrf.mxu0
    %v85 = vadd.f32 0.0, %v84
    %86 = vmatmul.f32.gmra.mxu0 %v50
    %v87 = vpop.f32.mrf.mxu0
    %v88 = vadd.f32 0.0, %v87
    %89 = vdwg.mxu0
    %vm90 = vcmask 261120
    %v91 = vsel %vm90, %v85, 0.0
    %92 = vadd.xlane.f32.xlu0 %v91
    %v93 = vpop.xlane.xlu0 %92
    %v94 = vsel %vm90, %v88, 0.0
    %95 = vadd.xlane.f32.xlu0 %v94
    %v96 = vpop.xlane.xlu0 %95
    %v97 = vrcp.pop 32.0
    %v98 = vmul.f32 32.0, %v97
    %v99 = vsub.f32 1.0, %v98
    %v100 = vmul.f32 %v97, %v99
    %v101 = vadd.f32 %v97, %v100
    %vm102 = vweird.f32 %v97
    %v103 = vsel %vm102, %v97, %v101
    %v104 = vmul.f32 %v93, %v103
    %v105 = vmul.f32 %v96, %v103
    %v106 = vsub.f32 %v85, %v104
    %v107 = vsub.f32 %v88, %v105
    %v108 = vmul.f32 %v106, %v106
    %v109 = vmul.f32 %v107, %v107
    %v110 = vsel %vm90, %v108, 0.0
    %111 = vadd.xlane.f32.xlu0 %v110
    %v112 = vpop.xlane.xlu0 %111
    %v113 = vsel %vm90, %v109, 0.0
    %114 = vadd.xlane.f32.xlu0 %v113
    %v115 = vpop.xlane.xlu0 %114
    %v116 = vmul.f32 %v112, %v103
    %v117 = vmul.f32 %v115, %v103
    %v118 = vadd.f32 %v116, 1e-05
    %v119 = vadd.f32 %v117, 1e-05
    %v120 = vrsqrt.pop %v118
    %v121 = vmul.f32 %v120, %v118
    %v122 = vmul.f32 %v121, %v120
    %v123 = vmul.f32 0.5, %v122
    %v124 = vsub.f32 1.5, %v123
    %v125 = vmul.f32 %v120, %v124
    %vm126 = vweird.f32 %v118
    %vm127 = vweird.f32 %v120
    %vm128 = vmor %vm126, %vm127
    %v129 = vsel %vm128, %v120, %v125
    %v130 = vrsqrt.pop %v119
    %v131 = vmul.f32 %v130, %v119
    %v132 = vmul.f32 %v131, %v130
    %v133 = vmul.f32 0.5, %v132
    %v134 = vsub.f32 1.5, %v133
    %v135 = vmul.f32 %v130, %v134
    %vm136 = vweird.f32 %v119
    %vm137 = vweird.f32 %v130
    %vm138 = vmor %vm136, %vm137
    %v139 = vsel %vm138, %v130, %v135
    %v140 = vmul.f32 %v106, %v129
    %v141 = vmul.f32 %v107, %v139
    %v142 = vld [vmem:[%s2] sm:$0x1]
    %v143 = vperm.slane %v142, 0
    %v144 = vmul.f32 %v140, %v143
    %v145 = vmul.f32 %v141, %v143
    %v146 = vld [vmem:[%s2 + $0x1] sm:$0x1]
    %v147 = vperm.slane %v146, 0
    %v148 = vadd.f32 %v144, %v147
    %v149 = vadd.f32 %v145, %v147
    %150 = vst.msk [vmem:[#allocation2] sm:$0xff] %vm90, %v148
    %151 = vst.msk [vmem:[#allocation2 + $0x8] sm:$0xff] %vm90, %v149
    // Predicated region
    $region14: #{tpu_custom_call.1} parent=1 // pred_check
      _
    $region15: #{tpu_custom_call.1} parent=1 // pred_check_branch
      %153 = sbr.rel (0) target = $region17
    $region16: #{tpu_custom_call.1} parent=1 // pred_region
      %155 = vsyncadd [#allocation3], 0
      %s156 = sshll.u32 [#allocation2], 4
      %s157 = int_to_ptr.vmem [resolvable:$true] %s156
      %s158 = sshll.u32 %s3, 4
      %s159 = int_to_ptr.hbm [resolvable:$true] %s158
      %164 = dma.vmem_to_hbm [thread:$0]  %s157, 256, %s159, [#allocation3], 128, 128, 8
    $region17: #{tpu_custom_call.1} parent=1 // pred_fallthru
      _
    // Predicated region
    $region18: #{tpu_custom_call.1} parent=1 // pred_check
      _
    $region19: #{tpu_custom_call.1} parent=1 // pred_check_branch
      %166 = sbr.rel (0) target = $region21
    $region20: #{tpu_custom_call.1} parent=1 // pred_region
      %168 = dma.done [#allocation3], 256
    $region21: #{tpu_custom_call.1} parent=1 // pred_fallthru
      _
    %169 = vsyncpa [#allocation3], 1

</llo_original>
